<compile_context>
chip_gen: v7x
topology: tpu7x:2x2x1
jax: 0.10.0
libtpu: 0.0.40
codegen_flags: <defaults>
</compile_context>

<pallas_src>
import math
import functools

import jax
import jax.numpy as jnp
from jax import lax
from jax.experimental import pallas as pl
from jax.experimental.pallas import tpu as pltpu


# x[B, K] contracted with w[N, K] -> [B, N]  (weights consumed untransposed)
_DOT_XT = (((1,), (1,)), ((), ()))


# ----------------------------- Pallas kernels ------------------------------

def _noisy_linear_train_kernel(x_ref, wmu_ref, wsig_ref, ei_ref, eo_ref,
                               bmu_ref, bsig_ref, beps_ref, o_ref, acc_ref):
    """One (batch-tile, out-tile, k-tile) step of
         y = x @ (Wmu + Wsig * (eps_out ⊗ eps_in))^T + (bmu + bsig*beps)
       computed as
         y = x @ Wmu^T + ((x*eps_in) @ Wsig^T) * eps_out + b
       so the noisy weight tile is never materialized."""
    k = pl.program_id(2)

    @pl.when(k == 0)
    def _init():
        acc_ref[...] = jnp.zeros_like(acc_ref)

    x = x_ref[...]                                           # [TB, TK] compute dt
    # Input-side factorized noise on the VPU in f32 (v5e has no bf16 VPU),
    # cast back to the MXU compute dtype for the second matmul.
    xe = (x.astype(jnp.float32) * ei_ref[...]).astype(x.dtype)

    acc_ref[...] += (
        lax.dot_general(x, wmu_ref[...], dimension_numbers=_DOT_XT,
                        preferred_element_type=jnp.float32)
        + lax.dot_general(xe, wsig_ref[...], dimension_numbers=_DOT_XT,
                          preferred_element_type=jnp.float32) * eo_ref[...])

    @pl.when(k == pl.num_programs(2) - 1)
    def _finalize():
        b = bmu_ref[...] + bsig_ref[...] * beps_ref[...]     # [1, TN] f32
        o_ref[...] = (acc_ref[...] + b).astype(o_ref.dtype)


def _noisy_linear_eval_kernel(x_ref, wmu_ref, bmu_ref, o_ref, acc_ref):
    k = pl.program_id(2)

    @pl.when(k == 0)
    def _init():
        acc_ref[...] = jnp.zeros_like(acc_ref)

    acc_ref[...] += lax.dot_general(x_ref[...], wmu_ref[...],
                                    dimension_numbers=_DOT_XT,
                                    preferred_element_type=jnp.float32)

    @pl.when(k == pl.num_programs(2) - 1)
    def _finalize():
        o_ref[...] = (acc_ref[...] + bmu_ref[...]).astype(o_ref.dtype)


# ------------------------------ Host wrapper -------------------------------

def _round_up(x, m):
    return (x + m - 1) // m * m


def _vmem_cap_bytes():
    try:
        return int(getattr(pltpu.get_tpu_info(), "vmem_capacity_bytes", 64 << 20))
    except Exception:
        return 64 << 20


@functools.partial(jax.jit, static_argnames=("out_features", "training"))
def _noisy_linear_forward_impl(x, wmu, wsig, ei, eo, bmu, bsig, beps,
                               *, out_features, training):
    B, in_f = x.shape
    out_p, in_p = wmu.shape
    out_dtype = x.dtype
    cdt = wmu.dtype                               # MXU compute dtype
    cbytes = jnp.dtype(cdt).itemsize

    # ---- tile selection (lane-dense, 128-granular; sublane 16 for 16-bit) ----
    sub = 16 if cbytes == 2 else 8
    b_p = _round_up(B, sub)
    tb = b_p if b_p <= 512 else 512               # whole batch resident when
    b_p = _round_up(b_p, tb)                      # small -> weights stream once

    tn = min(out_p, 256)
    while out_p % tn:
        tn -= 128
    tk = min(in_p, 512)
    while in_p % tk:
        tk -= 128

    # v7x has 2 TensorCores sharded over the parallel grid axes: prefer >= 2
    # parallel blocks whenever the layer allows it.
    if (b_p // tb) * (out_p // tn) < 2 and out_p >= 256:
        tn = 128

    grid = (b_p // tb, out_p // tn, in_p // tk)

    # ---- VMEM budget: 2x double-buffered inputs + 2x output + accumulator ----
    n_w = 2 if training else 1
    n_vec = 4 if training else 1                  # eps_out / bias row vectors
    step_in = (tb * tk * cbytes + n_w * tn * tk * cbytes
               + tk * 4 + n_vec * tn * 4)
    step_out = tb * tn * jnp.dtype(out_dtype).itemsize
    acc_bytes = tb * tn * 4
    needed = 2 * step_in + 2 * step_out + acc_bytes
    vmem_limit = int(min(max(2 * needed, 32 << 20),
                         int(_vmem_cap_bytes() * 0.75)))

    # ---- pad x per call (weights were padded once, outside this function) ----
    x_p = jnp.pad(x.astype(cdt), ((0, b_p - B), (0, in_p - in_f)))

    x_spec = pl.BlockSpec((tb, tk), lambda i, j, k: (i, k))
    w_spec = pl.BlockSpec((tn, tk), lambda i, j, k: (j, k))
    ei_spec = pl.BlockSpec((1, tk), lambda i, j, k: (0, k))
    row_spec = pl.BlockSpec((1, tn), lambda i, j, k: (0, j))
    o_spec = pl.BlockSpec((tb, tn), lambda i, j, k: (i, j))

    out_shape = jax.ShapeDtypeStruct((b_p, out_p), out_dtype)
    scratch = [pltpu.VMEM((tb, tn), jnp.float32)]
    cparams = pltpu.CompilerParams(
        dimension_semantics=("parallel", "parallel", "arbitrary"),
        vmem_limit_bytes=vmem_limit)

    if training:
        cost = pl.CostEstimate(
            flops=4 * b_p * out_p * in_p + 2 * b_p * in_p * (out_p // tn),
            transcendentals=0,
            bytes_accessed=(b_p * in_p * cbytes * (out_p // tn)
                            + 2 * out_p * in_p * cbytes * (b_p // tb)
                            + (in_p + 4 * out_p) * 4
                            + b_p * out_p * jnp.dtype(out_dtype).itemsize))
        y_p = pl.pallas_call(
            _noisy_linear_train_kernel,
            out_shape=out_shape,
            grid=grid,
            in_specs=[x_spec, w_spec, w_spec, ei_spec, row_spec,
                      row_spec, row_spec, row_spec],
            out_specs=o_spec,
            scratch_shapes=scratch,
            compiler_params=cparams,
            cost_estimate=cost,
        )(x_p, wmu, wsig, ei, eo, bmu, bsig, beps)
    else:
        cost = pl.CostEstimate(
            flops=2 * b_p * out_p * in_p,
            transcendentals=0,
            bytes_accessed=(b_p * in_p * cbytes * (out_p // tn)
                            + out_p * in_p * cbytes * (b_p // tb)
                            + out_p * 4
                            + b_p * out_p * jnp.dtype(out_dtype).itemsize))
        y_p = pl.pallas_call(
            _noisy_linear_eval_kernel,
            out_shape=out_shape,
            grid=grid,
            in_specs=[x_spec, w_spec, row_spec],
            out_specs=o_spec,
            scratch_shapes=scratch,
            compiler_params=cparams,
            cost_estimate=cost,
        )(x_p, wmu, bmu)

    return y_p[:B, :out_features]


def noisy_linear_forward(x, prepared, training=True):
    p = prepared
    return _noisy_linear_forward_impl(
        x, p["weight_mu"], p["weight_sigma"], p["weight_eps_in"],
        p["weight_eps_out"], p["bias_mu"], p["bias_sigma"], p["bias_epsilon"],
        out_features=p["out_features"], training=training)


# --------------------- Parameter / noise init + prepare --------------------

def _scale_noise(key, size):
    # x = randn(size); sign(x) * sqrt(|x|)   (factorized NoisyNet noise)
    x = jax.random.normal(key, (size,), dtype=jnp.float32)
    return jnp.sign(x) * jnp.sqrt(jnp.abs(x))


def init_noisy_linear(key, in_features, out_features, std_init=0.4):
    """Matches the PyTorch module: weight_epsilon = eps_out ⊗ eps_in (kept
    factorized), bias_epsilon = an independent scaled-noise draw."""
    k_wmu, k_bmu, k_ein, k_eout, k_beps = jax.random.split(key, 5)
    mu_range = 1.0 / math.sqrt(in_features)

    weight_mu = jax.random.uniform(
        k_wmu, (out_features, in_features), jnp.float32, -mu_range, mu_range)
    weight_sigma = jnp.full((out_features, in_features),
                            std_init / math.sqrt(in_features), jnp.float32)
    bias_mu = jax.random.uniform(
        k_bmu, (out_features,), jnp.float32, -mu_range, mu_range)
    bias_sigma = jnp.full((out_features,),
                          std_init / math.sqrt(out_features), jnp.float32)

    eps_in = _scale_noise(k_ein, in_features)
    eps_out = _scale_noise(k_eout, out_features)
    bias_epsilon = _scale_noise(k_beps, out_features)   # independent, per spec

    return {
        "weight_mu": weight_mu,
        "weight_sigma": weight_sigma,
        "weight_eps_in": eps_in.reshape(1, in_features),
        "weight_eps_out": eps_out.reshape(1, out_features),
        "bias_mu": bias_mu.reshape(1, out_features),
        "bias_sigma": bias_sigma.reshape(1, out_features),
        "bias_epsilon": bias_epsilon.reshape(1, out_features),
    }


def prepare_noisy_linear_params(params, compute_dtype=jnp.bfloat16):
    """Pad to 128-multiples ONCE (not per forward) and cast the big weight
    matrices to the MXU compute dtype (bf16 default; f32 accumulation happens
    inside the kernel).  Noise / bias vectors stay f32 for the VPU path."""
    out_f, in_f = params["weight_mu"].shape
    in_p = _round_up(in_f, 128)
    out_p = _round_up(out_f, 128)

    def pad2(a, rows, cols, dtype):
        a = jnp.asarray(a, dtype)
        return jnp.pad(a, ((0, rows - a.shape[0]), (0, cols - a.shape[1])))

    return {
        "out_features": out_f,
        "weight_mu": pad2(params["weight_mu"], out_p, in_p, compute_dtype),
        "weight_sigma": pad2(params["weight_sigma"], out_p, in_p, compute_dtype),
        "weight_eps_in": pad2(params["weight_eps_in"], 1, in_p, jnp.float32),
        "weight_eps_out": pad2(params["weight_eps_out"], 1, out_p, jnp.float32),
        "bias_mu": pad2(params["bias_mu"], 1, out_p, jnp.float32),
        "bias_sigma": pad2(params["bias_sigma"], 1, out_p, jnp.float32),
        "bias_epsilon": pad2(params["bias_epsilon"], 1, out_p, jnp.float32),
    }


# ------------------------------- Reference ---------------------------------

def noisy_linear_reference(x, params, training=True):
    if training:
        w_eps = params["weight_eps_out"].T @ params["weight_eps_in"]   # [out,in]
        w = params["weight_mu"] + params["weight_sigma"] * w_eps
        b = params["bias_mu"] + params["bias_sigma"] * params["bias_epsilon"]
    else:
        w, b = params["weight_mu"], params["bias_mu"]
    return x @ w.T + b


# ---------------------------------- Main ------------------------------------

if __name__ == "__main__":
    key = jax.random.PRNGKey(0)
    k_params, k_x, k_params2, k_x2 = jax.random.split(key, 4)

    # Small layer (padded internally 32 -> 128 / 64 -> 128).
    in_features, out_features, batch = 32, 64, 8
    params = init_noisy_linear(k_params, in_features, out_features, std_init=0.4)
    x = jax.random.normal(k_x, (batch, in_features), dtype=jnp.float32)

    ref_train = noisy_linear_reference(x, params, training=True)
    ref_eval = noisy_linear_reference(x, params, training=False)

    # ---- exact-precision path (f32 compute) ----
    prep_f32 = prepare_noisy_linear_params(params, compute_dtype=jnp.float32)
    y_train = jax.block_until_ready(noisy_linear_forward(x, prep_f32, training=True))
    y_eval = jax.block_until_ready(noisy_linear_forward(x, prep_f32, training=False))
    assert y_train.shape == (batch, out_features)
    assert y_eval.shape == (batch, out_features)
    assert jnp.allclose(y_train, ref_train, atol=1e-5, rtol=1e-5)
    assert jnp.allclose(y_eval, ref_eval, atol=1e-5, rtol=1e-5)

    # ---- performance path (bf16 weights/activations, f32 accumulation) ----
    prep_bf16 = prepare_noisy_linear_params(params, compute_dtype=jnp.bfloat16)
    y_bf16 = jax.block_until_ready(noisy_linear_forward(x, prep_bf16, training=True))
    assert jnp.allclose(y_bf16, ref_train, atol=5e-2, rtol=5e-2)

    # ---- a shape that exercises K-tiling + multiple out-tiles ----
    in2, out2, b2 = 640, 384, 16
    params2 = init_noisy_linear(k_params2, in2, out2, std_init=0.4)
    x2 = jax.random.normal(k_x2, (b2, in2), dtype=jnp.float32)
    prep2 = prepare_noisy_linear_params(params2, compute_dtype=jnp.float32)
    y2 = jax.block_until_ready(noisy_linear_forward(x2, prep2, training=True))
    ref2 = noisy_linear_reference(x2, params2, training=True)
    assert jnp.allclose(y2, ref2, atol=1e-4, rtol=1e-4)

    print("KERNEL_OK")
</pallas_src>

<mosaic_0001>
module attributes {stable_mosaic.version = 11 : i64} {
  func.func @_noisy_linear_train_kernel(%arg0: i32, %arg1: i32, %arg2: i32, %arg3: memref<8x128xf32, #tpu.memory_space<vmem>>, %arg4: memref<128x128xf32, #tpu.memory_space<vmem>>, %arg5: memref<128x128xf32, #tpu.memory_space<vmem>>, %arg6: memref<1x128xf32, #tpu.memory_space<vmem>>, %arg7: memref<1x128xf32, #tpu.memory_space<vmem>>, %arg8: memref<1x128xf32, #tpu.memory_space<vmem>>, %arg9: memref<1x128xf32, #tpu.memory_space<vmem>>, %arg10: memref<1x128xf32, #tpu.memory_space<vmem>>, %arg11: memref<8x128xf32, #tpu.memory_space<vmem>>, %arg12: memref<8x128xf32, #tpu.memory_space<vmem>>) attributes {dimension_semantics = [#tpu.dimension_semantics<parallel>, #tpu.dimension_semantics<parallel>, #tpu.dimension_semantics<arbitrary>], iteration_bounds = array<i64: 1, 1, 1>, scalar_prefetch = 0 : i64, scratch_operands = 1 : i64, tpu.core_type = #tpu.core_type<tc>, window_params = [{transform_indices = @transform_0, window_bounds = array<i64: 8, 128>}, {transform_indices = @transform_1, window_bounds = array<i64: 128, 128>}, {transform_indices = @transform_2, window_bounds = array<i64: 128, 128>}, {transform_indices = @transform_3, window_bounds = array<i64: 1, 128>}, {transform_indices = @transform_4, window_bounds = array<i64: 1, 128>}, {transform_indices = @transform_5, window_bounds = array<i64: 1, 128>}, {transform_indices = @transform_6, window_bounds = array<i64: 1, 128>}, {transform_indices = @transform_7, window_bounds = array<i64: 1, 128>}, {transform_indices = @transform_8, window_bounds = array<i64: 8, 128>}]} {
    %c0_i32 = arith.constant 0 : i32
    %0 = arith.cmpi eq, %arg2, %c0_i32 : i32
    %1 = arith.extui %0 : i1 to i32
    %c0_i32_0 = arith.constant 0 : i32
    %2 = arith.cmpi ne, %1, %c0_i32_0 : i32
    scf.if %2 {
      %cst_17 = arith.constant 0.000000e+00 : f32
      %21 = vector.broadcast %cst_17 : f32 to vector<8x128xf32>
      %c0_18 = arith.constant 0 : index
      %c0_19 = arith.constant 0 : index
      %22 = vector.load %arg12[%c0_18, %c0_19] : memref<8x128xf32, #tpu.memory_space<vmem>>, vector<8x128xf32>
      tpu.vector_store %arg12[%c0_18, %c0_19], %21 {strides = array<i32>} : memref<8x128xf32, #tpu.memory_space<vmem>>, vector<8x128xf32>,
    } else {
    }
    %c0 = arith.constant 0 : index
    %c0_1 = arith.constant 0 : index
    %3 = vector.load %arg3[%c0, %c0_1] : memref<8x128xf32, #tpu.memory_space<vmem>>, vector<8x128xf32>
    %c0_2 = arith.constant 0 : index
    %c0_3 = arith.constant 0 : index
    %4 = vector.load %arg6[%c0_2, %c0_3] : memref<1x128xf32, #tpu.memory_space<vmem>>, vector<1x128xf32>
    %5 = vector.broadcast %4 : vector<1x128xf32> to vector<8x128xf32>
    %6 = arith.mulf %3, %5 : vector<8x128xf32>
    %c0_4 = arith.constant 0 : index
    %c0_5 = arith.constant 0 : index
    %7 = vector.load %arg12[%c0_4, %c0_5] : memref<8x128xf32, #tpu.memory_space<vmem>>, vector<8x128xf32>
    %c0_6 = arith.constant 0 : index
    %c0_7 = arith.constant 0 : index
    %8 = vector.load %arg4[%c0_6, %c0_7] : memref<128x128xf32, #tpu.memory_space<vmem>>, vector<128x128xf32>
    %cst = arith.constant dense<0.000000e+00> : vector<8x128xf32>
    %9 = tpu.matmul %3, %8, %cst {dimension_numbers = #tpu.dot_dimension_numbers<[1], [1], [0], [0], [0, 0, 1, 0], [], []>} : vector<8x128xf32>, vector<128x128xf32>, vector<8x128xf32> -> vector<8x128xf32>
    %c0_8 = arith.constant 0 : index
    %c0_9 = arith.constant 0 : index
    %10 = vector.load %arg5[%c0_8, %c0_9] : memref<128x128xf32, #tpu.memory_space<vmem>>, vector<128x128xf32>
    %cst_10 = arith.constant dense<0.000000e+00> : vector<8x128xf32>
    %11 = tpu.matmul %6, %10, %cst_10 {dimension_numbers = #tpu.dot_dimension_numbers<[1], [1], [0], [0], [0, 0, 1, 0], [], []>} : vector<8x128xf32>, vector<128x128xf32>, vector<8x128xf32> -> vector<8x128xf32>
    %c0_11 = arith.constant 0 : index
    %c0_12 = arith.constant 0 : index
    %12 = vector.load %arg7[%c0_11, %c0_12] : memref<1x128xf32, #tpu.memory_space<vmem>>, vector<1x128xf32>
    %13 = vector.broadcast %12 : vector<1x128xf32> to vector<8x128xf32>
    %14 = arith.mulf %11, %13 : vector<8x128xf32>
    %15 = arith.addf %9, %14 : vector<8x128xf32>
    %16 = arith.addf %7, %15 : vector<8x128xf32>
    %c0_13 = arith.constant 0 : index
    %c0_14 = arith.constant 0 : index
    %17 = vector.load %arg12[%c0_13, %c0_14] : memref<8x128xf32, #tpu.memory_space<vmem>>, vector<8x128xf32>
    tpu.vector_store %arg12[%c0_13, %c0_14], %16 {strides = array<i32>} : memref<8x128xf32, #tpu.memory_space<vmem>>, vector<8x128xf32>,
    %c0_i32_15 = arith.constant 0 : i32
    %18 = arith.cmpi eq, %arg2, %c0_i32_15 : i32
    %19 = arith.extui %18 : i1 to i32
    %c0_i32_16 = arith.constant 0 : i32
    %20 = arith.cmpi ne, %19, %c0_i32_16 : i32
    scf.if %20 {
      %c0_17 = arith.constant 0 : index
      %c0_18 = arith.constant 0 : index
      %21 = vector.load %arg8[%c0_17, %c0_18] : memref<1x128xf32, #tpu.memory_space<vmem>>, vector<1x128xf32>
      %c0_19 = arith.constant 0 : index
      %c0_20 = arith.constant 0 : index
      %22 = vector.load %arg9[%c0_19, %c0_20] : memref<1x128xf32, #tpu.memory_space<vmem>>, vector<1x128xf32>
      %c0_21 = arith.constant 0 : index
      %c0_22 = arith.constant 0 : index
      %23 = vector.load %arg10[%c0_21, %c0_22] : memref<1x128xf32, #tpu.memory_space<vmem>>, vector<1x128xf32>
      %24 = arith.mulf %22, %23 : vector<1x128xf32>
      %25 = arith.addf %21, %24 : vector<1x128xf32>
      %c0_23 = arith.constant 0 : index
      %c0_24 = arith.constant 0 : index
      %26 = vector.load %arg12[%c0_23, %c0_24] : memref<8x128xf32, #tpu.memory_space<vmem>>, vector<8x128xf32>
      %27 = vector.broadcast %25 : vector<1x128xf32> to vector<8x128xf32>
      %28 = arith.addf %26, %27 : vector<8x128xf32>
      %c0_25 = arith.constant 0 : index
      %c0_26 = arith.constant 0 : index
      %29 = vector.load %arg11[%c0_25, %c0_26] : memref<8x128xf32, #tpu.memory_space<vmem>>, vector<8x128xf32>
      tpu.vector_store %arg11[%c0_25, %c0_26], %28 {strides = array<i32>} : memref<8x128xf32, #tpu.memory_space<vmem>>, vector<8x128xf32>,
    } else {
    }
    return
  }
  func.func @transform_0(%arg0: i32, %arg1: i32, %arg2: i32) -> (i32, i32) {
    %c0_i32 = arith.constant 0 : i32
    return %arg0, %arg2 : i32, i32
  }
  func.func @transform_1(%arg0: i32, %arg1: i32, %arg2: i32) -> (i32, i32) {
    %c0_i32 = arith.constant 0 : i32
    return %arg1, %arg2 : i32, i32
  }
  func.func @transform_2(%arg0: i32, %arg1: i32, %arg2: i32) -> (i32, i32) {
    %c0_i32 = arith.constant 0 : i32
    return %arg1, %arg2 : i32, i32
  }
  func.func @transform_3(%arg0: i32, %arg1: i32, %arg2: i32) -> (i32, i32) {
    %c0_i32 = arith.constant 0 : i32
    %c0_i32_0 = arith.constant 0 : i32
    return %c0_i32, %arg2 : i32, i32
  }
  func.func @transform_4(%arg0: i32, %arg1: i32, %arg2: i32) -> (i32, i32) {
    %c0_i32 = arith.constant 0 : i32
    %c0_i32_0 = arith.constant 0 : i32
    return %c0_i32, %arg1 : i32, i32
  }
  func.func @transform_5(%arg0: i32, %arg1: i32, %arg2: i32) -> (i32, i32) {
    %c0_i32 = arith.constant 0 : i32
    %c0_i32_0 = arith.constant 0 : i32
    return %c0_i32, %arg1 : i32, i32
  }
  func.func @transform_6(%arg0: i32, %arg1: i32, %arg2: i32) -> (i32, i32) {
    %c0_i32 = arith.constant 0 : i32
    %c0_i32_0 = arith.constant 0 : i32
    return %c0_i32, %arg1 : i32, i32
  }
  func.func @transform_7(%arg0: i32, %arg1: i32, %arg2: i32) -> (i32, i32) {
    %c0_i32 = arith.constant 0 : i32
    %c0_i32_0 = arith.constant 0 : i32
    return %c0_i32, %arg1 : i32, i32
  }
  func.func @transform_8(%arg0: i32, %arg1: i32, %arg2: i32) -> (i32, i32) {
    %c0_i32 = arith.constant 0 : i32
    return %arg0, %arg1 : i32, i32
  }
}

</mosaic_0001>

<llo_original>
// kernel: _noisy_linear_forward_impl.1
$region0: #{_noisy_linear_forward_impl.1}
  #allocation0 [shape = 'u32[]', space=smem, size = 0x4, offset = 0x4, fixed_abs, tag = 'smem constant byte address 0x4 - core index']
  #allocation1 [shape = 'u32[144,128]{1,0:T(1,128)}', space=vmem, size = 0x12000, scoped, tag = 'internal scratch']
  #allocation2 [shape = 'f32[8,128]{1,0:T(8,128)}', space=vmem, size = 0x1000, scoped, tag = 'scratch operand']
  %s0 = inlined_call_operand.vmem [shape: f32[8,128], index: 0, kind: input, shape index: {}]
  %s1 = inlined_call_operand.hbm [shape: f32[128,128], index: 1, kind: input, shape index: {}]
  %s2 = inlined_call_operand.hbm [shape: f32[128,128], index: 2, kind: input, shape index: {}]
  %s3 = inlined_call_operand.vmem [shape: f32[1,128], index: 3, kind: input, shape index: {}]
  %s4 = inlined_call_operand.vmem [shape: f32[1,128], index: 4, kind: input, shape index: {}]
  %s5 = inlined_call_operand.vmem [shape: f32[1,128], index: 5, kind: input, shape index: {}]
  %s6 = inlined_call_operand.vmem [shape: f32[1,128], index: 6, kind: input, shape index: {}]
  %s7 = inlined_call_operand.vmem [shape: f32[1,128], index: 7, kind: input, shape index: {}]
  %s8 = inlined_call_operand.hbm [shape: f32[8,128], index: 8, kind: output, shape index: {}]
  %s9 = sld [smem:[#allocation0]]
  $region58: #{_noisy_linear_forward_impl.1} parent=0
    _
  %s11 = ssub.s32 1, %s9
  %s12 = scalar_select 0, %s11, %s9
  $region1: #{_noisy_linear_forward_impl.1} parent=0
    #allocation3 [shape = 'u8[65536]{0}', space=vmem, size = 0x10000, scoped, tag = 'input window, operand 1, single buffered']
    #allocation4 [shape = 's32[1]{0}', space=sflag, size = 0x4, scoped, tag = 'scoped memory for _noisy_linear_forward_impl.1']
    #allocation5 [shape = 's32[1]{0}', space=sflag, size = 0x4, scoped, tag = 'scoped memory for _noisy_linear_forward_impl.1']
    #allocation6 [shape = 'u8[65536]{0}', space=vmem, size = 0x10000, scoped, tag = 'input window, operand 2, single buffered']
    #allocation7 [shape = 's32[1]{0}', space=sflag, size = 0x4, scoped, tag = 'scoped memory for _noisy_linear_forward_impl.1']
    #allocation8 [shape = 'u8[4096]{0}', space=vmem, size = 0x1000, scoped, tag = 'output window, operand 0, single buffered']
    %13 = vsyncpa [#allocation4], 0
    %14 = vsyncpa [#allocation7], 0
    %15 = vsyncpa [#allocation5], 0
    // Predicated region
    $region2: #{_noisy_linear_forward_impl.1} parent=1 // pred_check
      _
    $region3: #{_noisy_linear_forward_impl.1} parent=1 // pred_check_branch
      %17 = sbr.rel (0) target = $region5
    $region4: #{_noisy_linear_forward_impl.1} parent=1 // pred_region
      _
    $region5: #{_noisy_linear_forward_impl.1} parent=1 // pred_fallthru
      _
    // Predicated region
    $region6: #{_noisy_linear_forward_impl.1} parent=1 // pred_check
      _
    $region7: #{_noisy_linear_forward_impl.1} parent=1 // pred_check_branch
      %19 = sbr.rel (0) target = $region9
    $region8: #{_noisy_linear_forward_impl.1} parent=1 // pred_region
      %s21 = ssub.s32 2048, 2048
      %22 = vsyncadd [#allocation4], %s21
      %s23 = sshll.u32 [#allocation3], 4
      %s24 = int_to_ptr.vmem [resolvable:$true] %s23
      %29 = dma.hbm_to_vmem [thread:$0]  %s1, 2048, %s24, [#allocation4], 128, 128, 8
    $region9: #{_noisy_linear_forward_impl.1} parent=1 // pred_fallthru
      _
    // Predicated region
    $region10: #{_noisy_linear_forward_impl.1} parent=1 // pred_check
      _
    $region11: #{_noisy_linear_forward_impl.1} parent=1 // pred_check_branch
      %31 = sbr.rel (0) target = $region13
    $region12: #{_noisy_linear_forward_impl.1} parent=1 // pred_region
      %s33 = ssub.s32 2048, 2048
      %34 = vsyncadd [#allocation7], %s33
      %s35 = sshll.u32 [#allocation6], 4
      %s36 = int_to_ptr.vmem [resolvable:$true] %s35
      %41 = dma.hbm_to_vmem [thread:$0]  %s2, 2048, %s36, [#allocation7], 128, 128, 8
    $region13: #{_noisy_linear_forward_impl.1} parent=1 // pred_fallthru
      _
    // Predicated region
    $region14: #{_noisy_linear_forward_impl.1} parent=1 // pred_check
      _
    $region15: #{_noisy_linear_forward_impl.1} parent=1 // pred_check_branch
      %43 = sbr.rel (0) target = $region17
    $region16: #{_noisy_linear_forward_impl.1} parent=1 // pred_region
      _
    $region17: #{_noisy_linear_forward_impl.1} parent=1 // pred_fallthru
      _
    // Predicated region
    $region18: #{_noisy_linear_forward_impl.1} parent=1 // pred_check
      _
    $region19: #{_noisy_linear_forward_impl.1} parent=1 // pred_check_branch
      %45 = sbr.rel (0) target = $region21
    $region20: #{_noisy_linear_forward_impl.1} parent=1 // pred_region
      _
    $region21: #{_noisy_linear_forward_impl.1} parent=1 // pred_fallthru
      _
    // Predicated region
    $region22: #{_noisy_linear_forward_impl.1} parent=1 // pred_check
      _
    $region23: #{_noisy_linear_forward_impl.1} parent=1 // pred_check_branch
      %47 = sbr.rel (0) target = $region25
    $region24: #{_noisy_linear_forward_impl.1} parent=1 // pred_region
      _
    $region25: #{_noisy_linear_forward_impl.1} parent=1 // pred_fallthru
      _
    // Predicated region
    $region26: #{_noisy_linear_forward_impl.1} parent=1 // pred_check
      _
    $region27: #{_noisy_linear_forward_impl.1} parent=1 // pred_check_branch
      %49 = sbr.rel (0) target = $region29
    $region28: #{_noisy_linear_forward_impl.1} parent=1 // pred_region
      _
    $region29: #{_noisy_linear_forward_impl.1} parent=1 // pred_fallthru
      _
    // Predicated region
    $region30: #{_noisy_linear_forward_impl.1} parent=1 // pred_check
      _
    $region31: #{_noisy_linear_forward_impl.1} parent=1 // pred_check_branch
      %51 = sbr.rel (0) target = $region33
    $region32: #{_noisy_linear_forward_impl.1} parent=1 // pred_region
      _
    $region33: #{_noisy_linear_forward_impl.1} parent=1 // pred_fallthru
      _
    // Predicated region
    $region34: #{_noisy_linear_forward_impl.1} parent=1 // pred_check
      _
    $region35: #{_noisy_linear_forward_impl.1} parent=1 // pred_check_branch
      %53 = sbr.rel (0) target = $region37
    $region36: #{_noisy_linear_forward_impl.1} parent=1 // pred_region
      %54 = dma.done [#allocation4], 2048
    $region37: #{_noisy_linear_forward_impl.1} parent=1 // pred_fallthru
      _
    // Predicated region
    $region38: #{_noisy_linear_forward_impl.1} parent=1 // pred_check
      _
    $region39: #{_noisy_linear_forward_impl.1} parent=1 // pred_check_branch
      %56 = sbr.rel (0) target = $region41
    $region40: #{_noisy_linear_forward_impl.1} parent=1 // pred_region
      %57 = dma.done [#allocation7], 2048
    $region41: #{_noisy_linear_forward_impl.1} parent=1 // pred_fallthru
      _
    %p58 = scmp.eq.s32.totalorder 0, 0
    // Predicated region
    $region42: #{_noisy_linear_forward_impl.1} parent=1 // pred_check
      %p59 = pneg %p58
    $region43: #{_noisy_linear_forward_impl.1} parent=1 // pred_check_branch
      %61 = sbr.rel (%p59) target = $region45
    $region44: #{_noisy_linear_forward_impl.1} parent=1 // pred_region
      %62 = vst [vmem:[#allocation2] sm:$0xff] 0.0
    $region45: #{_noisy_linear_forward_impl.1} parent=1 // pred_fallthru
      _
    %v63 = vld [vmem:[%s0] sm:$0xff]
    %v64 = vld [vmem:[%s3] sm:$0x1]
    %v66 = vlaneseq
    %v67 = vshrl.u32 %v66, 7
    %v68 = vsub.s32 0, %v67
    %v69 = vrot.slane %v64, %v68
    %v71 = vmul.f32 %v63, %v69
    %v72 = vld [vmem:[#allocation2] sm:$0xff]
    %v73 = vld [vmem:[#allocation3] sm:$0xff]
    %v74 = vld [vmem:[#allocation3 + $0x8] sm:$0xff]
    %v75 = vld [vmem:[#allocation3 + $0x10] sm:$0xff]
    %v76 = vld [vmem:[#allocation3 + $0x18] sm:$0xff]
    %v77 = vld [vmem:[#allocation3 + $0x20] sm:$0xff]
    %v78 = vld [vmem:[#allocation3 + $0x28] sm:$0xff]
    %v79 = vld [vmem:[#allocation3 + $0x30] sm:$0xff]
    %v80 = vld [vmem:[#allocation3 + $0x38] sm:$0xff]
    %v81 = vld [vmem:[#allocation3 + $0x40] sm:$0xff]
    %v82 = vld [vmem:[#allocation3 + $0x48] sm:$0xff]
    %v83 = vld [vmem:[#allocation3 + $0x50] sm:$0xff]
    %v84 = vld [vmem:[#allocation3 + $0x58] sm:$0xff]
    %v85 = vld [vmem:[#allocation3 + $0x60] sm:$0xff]
    %v86 = vld [vmem:[#allocation3 + $0x68] sm:$0xff]
    %v87 = vld [vmem:[#allocation3 + $0x70] sm:$0xff]
    %v88 = vld [vmem:[#allocation3 + $0x78] sm:$0xff]
    %v89 = vld [vmem:[#allocation6] sm:$0xff]
    %v90 = vld [vmem:[#allocation6 + $0x8] sm:$0xff]
    %v91 = vld [vmem:[#allocation6 + $0x10] sm:$0xff]
    %v92 = vld [vmem:[#allocation6 + $0x18] sm:$0xff]
    %v93 = vld [vmem:[#allocation6 + $0x20] sm:$0xff]
    %v94 = vld [vmem:[#allocation6 + $0x28] sm:$0xff]
    %v95 = vld [vmem:[#allocation6 + $0x30] sm:$0xff]
    %v96 = vld [vmem:[#allocation6 + $0x38] sm:$0xff]
    %v97 = vld [vmem:[#allocation6 + $0x40] sm:$0xff]
    %v98 = vld [vmem:[#allocation6 + $0x48] sm:$0xff]
    %v99 = vld [vmem:[#allocation6 + $0x50] sm:$0xff]
    %v100 = vld [vmem:[#allocation6 + $0x58] sm:$0xff]
    %v101 = vld [vmem:[#allocation6 + $0x60] sm:$0xff]
    %v102 = vld [vmem:[#allocation6 + $0x68] sm:$0xff]
    %v103 = vld [vmem:[#allocation6 + $0x70] sm:$0xff]
    %v104 = vld [vmem:[#allocation6 + $0x78] sm:$0xff]
    %105 = vmatprep.subr.mxu0 0.0
    %106 = vmatpush1.xpose.msra.mxu0 %v89
    %107 = vmatprep.subr.mxu0 0.0
    %108 = vmatpush1.xpose.msra.mxu0 %v90
    %109 = vmatprep.subr.mxu0 0.0
    %110 = vmatpush1.xpose.msra.mxu0 %v91
    %111 = vmatprep.subr.mxu0 0.0
    %112 = vmatpush1.xpose.msra.mxu0 %v92
    %113 = vmatprep.subr.mxu0 0.0
    %114 = vmatpush1.xpose.msra.mxu0 %v93
    %115 = vmatprep.subr.mxu0 0.0
    %116 = vmatpush1.xpose.msra.mxu0 %v94
    %117 = vmatprep.subr.mxu0 0.0
    %118 = vmatpush1.xpose.msra.mxu0 %v95
    %119 = vmatprep.subr.mxu0 0.0
    %120 = vmatpush1.xpose.msra.mxu0 %v96
    %121 = vmatprep.subr.mxu0 0.0
    %122 = vmatpush1.xpose.msra.mxu0 %v97
    %123 = vmatprep.subr.mxu0 0.0
    %124 = vmatpush1.xpose.msra.mxu0 %v98
    %125 = vmatprep.subr.mxu0 0.0
    %126 = vmatpush1.xpose.msra.mxu0 %v99
    %127 = vmatprep.subr.mxu0 0.0
    %128 = vmatpush1.xpose.msra.mxu0 %v100
    %129 = vmatprep.subr.mxu0 0.0
    %130 = vmatpush1.xpose.msra.mxu0 %v101
    %131 = vmatprep.subr.mxu0 0.0
    %132 = vmatpush1.xpose.msra.mxu0 %v102
    %133 = vmatprep.subr.mxu0 0.0
    %134 = vmatpush1.xpose.msra.mxu0 %v103
    %135 = vmatprep.subr.mxu0 0.0
    %136 = vmatpush1.xpose.msra.mxu0 %v104
    %137 = vmatprep.subr.mxu0 0.0
    %138 = vmatpush1.xpose.msra.mxu0 0.0
    %139 = vmatprep.subr.mxu0 0.0
    %140 = vmatpush1.xpose.msra.mxu0 0.0
    %141 = vmatprep.subr.mxu0 0.0
    %142 = vmatpush1.xpose.msra.mxu0 0.0
    %143 = vmatprep.subr.mxu0 0.0
    %144 = vmatpush1.xpose.msra.mxu0 0.0
    %145 = vmatprep.subr.mxu0 0.0
    %146 = vmatpush1.xpose.msra.mxu0 0.0
    %147 = vmatprep.subr.mxu0 0.0
    %148 = vmatpush1.xpose.msra.mxu0 0.0
    %149 = vmatprep.subr.mxu0 0.0
    %150 = vmatpush1.xpose.msra.mxu0 0.0
    %151 = vmatprep.subr.mxu0 0.0
    %152 = vmatpush1.xpose.msra.mxu0 0.0
    %153 = vmatprep.subr.mxu0 0.0
    %154 = vmatpush1.xpose.msra.mxu0 0.0
    %155 = vmatprep.subr.mxu0 0.0
    %156 = vmatpush1.xpose.msra.mxu0 0.0
    %157 = vmatprep.subr.mxu0 0.0
    %158 = vmatpush1.xpose.msra.mxu0 0.0
    %159 = vmatprep.subr.mxu0 0.0
    %160 = vmatpush1.xpose.msra.mxu0 0.0
    %161 = vmatprep.subr.mxu0 0.0
    %162 = vmatpush1.xpose.msra.mxu0 0.0
    %163 = vmatprep.subr.mxu0 0.0
    %164 = vmatpush1.xpose.msra.mxu0 0.0
    %165 = vmatprep.subr.mxu0 0.0
    %166 = vmatpush1.xpose.msra.mxu0 0.0
    %167 = vmatprep.subr.mxu0 0.0
    %168 = vmatpush1.xpose.msra.mxu0 0.0
    %169 = vmatprep.mubr.f32.mxu0 0.0
    %170 = vmatmul.mubr.f32.gmra.mrb[0].mxu0 %v71
    %v171 = vpop.f32.mrb[0].mxu0
    %v172 = vadd.f32 0.0, %v171
    %v173 = vpop.f32.mrb[0].mxu0
    %174 = vdwg.mxu0
    %v175 = vld [vmem:[%s4] sm:$0x1]
    %v177 = vlaneseq
    %v178 = vshrl.u32 %v177, 7
    %v179 = vsub.s32 0, %v178
    %v180 = vrot.slane %v175, %v179
    %v182 = vmul.f32 %v172, %v180
    %183 = vmatprep.subr.mxu0 0.0
    %184 = vmatpush1.xpose.msra.mxu0 %v73
    %185 = vmatprep.subr.mxu0 0.0
    %186 = vmatpush1.xpose.msra.mxu0 %v74
    %187 = vmatprep.subr.mxu0 0.0
    %188 = vmatpush1.xpose.msra.mxu0 %v75
    %189 = vmatprep.subr.mxu0 0.0
    %190 = vmatpush1.xpose.msra.mxu0 %v76
    %191 = vmatprep.subr.mxu0 0.0
    %192 = vmatpush1.xpose.msra.mxu0 %v77
    %193 = vmatprep.subr.mxu0 0.0
    %194 = vmatpush1.xpose.msra.mxu0 %v78
    %195 = vmatprep.subr.mxu0 0.0
    %196 = vmatpush1.xpose.msra.mxu0 %v79
    %197 = vmatprep.subr.mxu0 0.0
    %198 = vmatpush1.xpose.msra.mxu0 %v80
    %199 = vmatprep.subr.mxu0 0.0
    %200 = vmatpush1.xpose.msra.mxu0 %v81
    %201 = vmatprep.subr.mxu0 0.0
    %202 = vmatpush1.xpose.msra.mxu0 %v82
    %203 = vmatprep.subr.mxu0 0.0
    %204 = vmatpush1.xpose.msra.mxu0 %v83
    %205 = vmatprep.subr.mxu0 0.0
    %206 = vmatpush1.xpose.msra.mxu0 %v84
    %207 = vmatprep.subr.mxu0 0.0
    %208 = vmatpush1.xpose.msra.mxu0 %v85
    %209 = vmatprep.subr.mxu0 0.0
    %210 = vmatpush1.xpose.msra.mxu0 %v86
    %211 = vmatprep.subr.mxu0 0.0
    %212 = vmatpush1.xpose.msra.mxu0 %v87
    %213 = vmatprep.subr.mxu0 0.0
    %214 = vmatpush1.xpose.msra.mxu0 %v88
    %215 = vmatprep.subr.mxu0 0.0
    %216 = vmatpush1.xpose.msra.mxu0 0.0
    %217 = vmatprep.subr.mxu0 0.0
    %218 = vmatpush1.xpose.msra.mxu0 0.0
    %219 = vmatprep.subr.mxu0 0.0
    %220 = vmatpush1.xpose.msra.mxu0 0.0
    %221 = vmatprep.subr.mxu0 0.0
    %222 = vmatpush1.xpose.msra.mxu0 0.0
    %223 = vmatprep.subr.mxu0 0.0
    %224 = vmatpush1.xpose.msra.mxu0 0.0
    %225 = vmatprep.subr.mxu0 0.0
    %226 = vmatpush1.xpose.msra.mxu0 0.0
    %227 = vmatprep.subr.mxu0 0.0
    %228 = vmatpush1.xpose.msra.mxu0 0.0
    %229 = vmatprep.subr.mxu0 0.0
    %230 = vmatpush1.xpose.msra.mxu0 0.0
    %231 = vmatprep.subr.mxu0 0.0
    %232 = vmatpush1.xpose.msra.mxu0 0.0
    %233 = vmatprep.subr.mxu0 0.0
    %234 = vmatpush1.xpose.msra.mxu0 0.0
    %235 = vmatprep.subr.mxu0 0.0
    %236 = vmatpush1.xpose.msra.mxu0 0.0
    %237 = vmatprep.subr.mxu0 0.0
    %238 = vmatpush1.xpose.msra.mxu0 0.0
    %239 = vmatprep.subr.mxu0 0.0
    %240 = vmatpush1.xpose.msra.mxu0 0.0
    %241 = vmatprep.subr.mxu0 0.0
    %242 = vmatpush1.xpose.msra.mxu0 0.0
    %243 = vmatprep.subr.mxu0 0.0
    %244 = vmatpush1.xpose.msra.mxu0 0.0
    %245 = vmatprep.subr.mxu0 0.0
    %246 = vmatpush1.xpose.msra.mxu0 0.0
    %247 = vmatprep.mubr.f32.mxu0 0.0
    %248 = vmatmul.mubr.f32.gmra.mrb[0].mxu0 %v63
    %v249 = vpop.f32.mrb[0].mxu0
    %v250 = vadd.f32 %v182, %v249
    %v251 = vpop.f32.mrb[0].mxu0
    %252 = vdwg.mxu0
    %v253 = vadd.f32 %v72, %v250
    %254 = vst [vmem:[#allocation2] sm:$0xff] %v253
    // Predicated region
    $region46: #{_noisy_linear_forward_impl.1} parent=1 // pred_check
      %p255 = pneg %p58
    $region47: #{_noisy_linear_forward_impl.1} parent=1 // pred_check_branch
      %257 = sbr.rel (%p255) target = $region49
    $region48: #{_noisy_linear_forward_impl.1} parent=1 // pred_region
      %v258 = vld [vmem:[%s5] sm:$0x1]
      %v259 = vld [vmem:[%s6] sm:$0x1]
      %v260 = vld [vmem:[%s7] sm:$0x1]
      %v261 = vmul.f32 %v259, %v260
      %v262 = vadd.f32 %v258, %v261
      %v263 = vld [vmem:[#allocation2] sm:$0xff]
      %v265 = vlaneseq
      %v266 = vshrl.u32 %v265, 7
      %v267 = vsub.s32 0, %v266
      %v268 = vrot.slane %v262, %v267
      %v270 = vadd.f32 %v263, %v268
      %271 = vst [vmem:[#allocation8] sm:$0xff] %v270
    $region49: #{_noisy_linear_forward_impl.1} parent=1 // pred_fallthru
      _
    // Predicated region
    $region50: #{_noisy_linear_forward_impl.1} parent=1 // pred_check
      _
    $region51: #{_noisy_linear_forward_impl.1} parent=1 // pred_check_branch
      %273 = sbr.rel (0) target = $region53
    $region52: #{_noisy_linear_forward_impl.1} parent=1 // pred_region
      %s275 = ssub.s32 128, 128
      %276 = vsyncadd [#allocation5], %s275
      %s278 = sshll.u32 [#allocation8], 4
      %s279 = int_to_ptr.vmem [resolvable:$true] %s278
      %281 = dma.vmem_to_hbm [thread:$0]  %s279, 128, %s8, [#allocation5]
    $region53: #{_noisy_linear_forward_impl.1} parent=1 // pred_fallthru
      _
    // Predicated region
    $region54: #{_noisy_linear_forward_impl.1} parent=1 // pred_check
      _
    $region55: #{_noisy_linear_forward_impl.1} parent=1 // pred_check_branch
      %283 = sbr.rel (0) target = $region57
    $region56: #{_noisy_linear_forward_impl.1} parent=1 // pred_region
      %284 = dma.done [#allocation5], 128
    $region57: #{_noisy_linear_forward_impl.1} parent=1 // pred_fallthru
      _
    %285 = vsyncpa [#allocation4], 1
    %286 = vsyncpa [#allocation7], 1
    %287 = vsyncpa [#allocation5], 1

</llo_original>
